<compile_context>
chip_gen: v5e
topology: v5e:2x2
jax: 0.10.0
libtpu: 0.0.40
codegen_flags: <defaults>
</compile_context>

<pallas_src>
import functools

import jax
import jax.numpy as jnp
from jax import lax
from jax.experimental import pallas as pl
from jax.experimental.pallas import tpu as pltpu


# ----------------------------- config -----------------------------

VOCAB = 100
MAX_POS = 16
TYPE_VOCAB = 2
HIDDEN = 32
HEADS = 4
HEAD_DIM = HIDDEN // HEADS
FFN = 64
LAYERS = 2
LN_EPS = 1e-12

ACT_DTYPE = jnp.bfloat16          # activations / MXU weights
_INV_SQRT2 = 0.7071067811865476   # hoisted constant for exact (erf) GELU
_VMEM_LIMIT = 32 * 1024 * 1024    # safe on v5e/v6e/v7x scoped budgets


def _row_tile(m, cap=512):
    """Row-block size: full array if small, else the largest sublane-aligned
    (multiple-of-8) divisor <= cap; falls back to a single block rather than a
    tiny tile that violates (8,128) alignment or drowns in per-step overhead."""
    if m <= cap:
        return m
    for t in range(cap - cap % 8, 7, -8):
        if m % t == 0:
            return t
    return m


# ----------------------------- Pallas kernels -----------------------------

def ln_kernel(x_ref, g_ref, b_ref, o_ref, *, eps):
    """o = LayerNorm(x) * gamma + beta (no residual — used for embeddings)."""
    x = x_ref[...].astype(jnp.float32)
    mu = jnp.mean(x, axis=-1, keepdims=True)
    var = jnp.mean((x - mu) ** 2, axis=-1, keepdims=True)
    y = (x - mu) * lax.rsqrt(var + eps)
    o_ref[...] = (y * g_ref[...].astype(jnp.float32)
                  + b_ref[...].astype(jnp.float32)).astype(o_ref.dtype)


def encoder_layer_kernel(x_ref, bias_ref,
                         wq_ref, wk_ref, wv_ref, bq_ref, bk_ref, bv_ref,
                         wo_ref, bo_ref, ln1_g_ref, ln1_b_ref,
                         w1_ref, b1_ref, w2_ref, b2_ref, ln2_g_ref, ln2_b_ref,
                         o_ref, *, heads, scale, eps):
    """One full transformer encoder layer for one batch element, fused.

    x block:    (1, S, H)   bf16 hidden state
    bias block: (1, 1, S)   f32 additive attention mask (shared across heads/rows)
    out block:  (1, S, H)   bf16, written once (lane-dense over H)
    """
    x = x_ref[0]                                  # (S, H) bf16
    bias = bias_ref[0].astype(jnp.float32)        # (1, S) — broadcasts over q rows
    S, H = x.shape

    # ---- multi-head self-attention ----
    # Per-head weights are LEADING-dim slices of head-major weight tensors (free);
    # the O-projection is applied per head and accumulated, so head contexts are
    # never lane-sliced or lane-concatenated.
    attn = jnp.zeros((S, H), jnp.float32)
    for h in range(heads):
        q = (jnp.dot(x, wq_ref[h], preferred_element_type=jnp.float32)
             + bq_ref[h]).astype(x.dtype)                       # (S, d)
        k = (jnp.dot(x, wk_ref[h], preferred_element_type=jnp.float32)
             + bk_ref[h]).astype(x.dtype)                       # (S, d)
        v = (jnp.dot(x, wv_ref[h], preferred_element_type=jnp.float32)
             + bv_ref[h]).astype(x.dtype)                       # (S, d)
        # q @ k^T without an explicit transpose (contract last dims on the MXU)
        s = lax.dot_general(q, k, (((1,), (1,)), ((), ())),
                            preferred_element_type=jnp.float32) * scale + bias
        m = jnp.max(s, axis=-1, keepdims=True)
        p = jnp.exp(s - m)
        inv = pl.reciprocal(jnp.sum(p, axis=-1, keepdims=True), approx=True)
        ctx = jnp.dot(p.astype(x.dtype), v,
                      preferred_element_type=jnp.float32) * inv  # (S, d)
        # head merge absorbed into the O-projection: sum_h ctx_h @ Wo[h]
        attn = attn + jnp.dot(ctx.astype(x.dtype), wo_ref[h],
                              preferred_element_type=jnp.float32)
    # TODO(synk): at real E5-large scale (S=512, 16 heads) tile queries flash-style
    # (grid=(B, S//tq), online softmax m/l/acc in VMEM scratch) and batch heads in
    # one dot_general batch dim instead of one (S,S) score matrix per head.

    # ---- O-projection epilogue: + bias + residual + LayerNorm (f32 stats) ----
    r1 = attn + bo_ref[...] + x.astype(jnp.float32)
    mu1 = jnp.mean(r1, axis=-1, keepdims=True)
    var1 = jnp.mean((r1 - mu1) ** 2, axis=-1, keepdims=True)
    h1f = (r1 - mu1) * lax.rsqrt(var1 + eps) * ln1_g_ref[...] + ln1_b_ref[...]
    h1 = h1f.astype(x.dtype)                                     # (S, H) bf16

    # ---- FFN: GELU(h1 W1 + b1) W2 + b2 + h1, LN2 — intermediate stays in VMEM ----
    ff = jnp.dot(h1, w1_ref[...], preferred_element_type=jnp.float32) + b1_ref[...]
    ff = 0.5 * ff * (1.0 + lax.erf(ff * _INV_SQRT2))   # exact erf GELU (HF default)
    # TODO(synk): on v5e prefer the tanh-approx GELU (EUP slot) to avoid a
    # VALU-bound erf polynomial on a (tm, 4H) f32 tile.
    y = jnp.dot(ff.astype(x.dtype), w2_ref[...],
                preferred_element_type=jnp.float32) + b2_ref[...] + h1f
    mu2 = jnp.mean(y, axis=-1, keepdims=True)
    var2 = jnp.mean((y - mu2) ** 2, axis=-1, keepdims=True)
    out = (y - mu2) * lax.rsqrt(var2 + eps) * ln2_g_ref[...] + ln2_b_ref[...]
    o_ref[0] = out.astype(o_ref.dtype)


# ----------------------------- Pallas wrappers -----------------------------

def pallas_layernorm(x, gamma, beta, eps=LN_EPS):
    M, H = x.shape
    tm = _row_tile(M)
    kernel = functools.partial(ln_kernel, eps=eps)
    return pl.pallas_call(
        kernel,
        out_shape=jax.ShapeDtypeStruct((M, H), x.dtype),
        grid=(M // tm,),
        in_specs=[
            pl.BlockSpec((tm, H), lambda i: (i, 0)),
            pl.BlockSpec((1, H), lambda i: (0, 0)),
            pl.BlockSpec((1, H), lambda i: (0, 0)),
        ],
        out_specs=pl.BlockSpec((tm, H), lambda i: (i, 0)),
        compiler_params=pltpu.CompilerParams(
            dimension_semantics=("parallel",),
            vmem_limit_bytes=_VMEM_LIMIT),
    )(x, gamma.reshape(1, H), beta.reshape(1, H))


def _const_spec(shape):
    """BlockSpec covering the full array, invariant across the grid (not re-DMA'd)."""
    n = len(shape)
    return pl.BlockSpec(shape, lambda b, n=n: (0,) * n)


def pallas_encoder_layer(x, bias, lp, scale):
    """x: (B, S, H) bf16; bias: (B, 1, S) f32; returns (B, S, H) bf16."""
    B, S, H = x.shape
    heads, _, d = lp["wq"].shape
    ffn = lp["w1"].shape[1]
    kernel = functools.partial(encoder_layer_kernel,
                               heads=heads, scale=scale, eps=LN_EPS)
    return pl.pallas_call(
        kernel,
        out_shape=jax.ShapeDtypeStruct((B, S, H), x.dtype),
        grid=(B,),
        in_specs=[
            pl.BlockSpec((1, S, H), lambda b: (b, 0, 0)),      # hidden state
            pl.BlockSpec((1, 1, S), lambda b: (b, 0, 0)),      # attention bias
            _const_spec((heads, H, d)),                        # wq (head-major)
            _const_spec((heads, H, d)),                        # wk
            _const_spec((heads, H, d)),                        # wv
            _const_spec((heads, 1, d)),                        # bq
            _const_spec((heads, 1, d)),                        # bk
            _const_spec((heads, 1, d)),                        # bv
            _const_spec((heads, d, H)),                        # wo (head-major)
            _const_spec((1, H)),                               # bo
            _const_spec((1, H)),                               # ln1 gamma
            _const_spec((1, H)),                               # ln1 beta
            _const_spec((H, ffn)),                             # ffn1 w
            _const_spec((1, ffn)),                             # ffn1 b
            _const_spec((ffn, H)),                             # ffn2 w
            _const_spec((1, H)),                               # ffn2 b
            _const_spec((1, H)),                               # ln2 gamma
            _const_spec((1, H)),                               # ln2 beta
        ],
        out_specs=pl.BlockSpec((1, S, H), lambda b: (b, 0, 0)),
        compiler_params=pltpu.CompilerParams(
            dimension_semantics=("parallel",),
            vmem_limit_bytes=_VMEM_LIMIT),
    )(x, bias, lp["wq"], lp["wk"], lp["wv"], lp["bq"], lp["bk"], lp["bv"],
      lp["wo"], lp["bo"], lp["ln1_g"], lp["ln1_b"],
      lp["w1"], lp["b1"], lp["w2"], lp["b2"], lp["ln2_g"], lp["ln2_b"])


# ----------------------------- Model definition -----------------------------

def init_params(key):
    def dense_wb(k, fan_in, fan_out):
        k1, k2 = jax.random.split(k)
        w = 0.02 * jax.random.normal(k1, (fan_in, fan_out), jnp.float32)
        b = 0.02 * jax.random.normal(k2, (fan_out,), jnp.float32)
        return w, b

    keys = jax.random.split(key, 8 + LAYERS)
    pool_w, pool_b = dense_wb(keys[3], HIDDEN, HIDDEN)
    params = {
        "word_emb": 0.02 * jax.random.normal(keys[0], (VOCAB, HIDDEN), jnp.float32),
        "pos_emb": 0.02 * jax.random.normal(keys[1], (MAX_POS, HIDDEN), jnp.float32),
        "type_emb": 0.02 * jax.random.normal(keys[2], (TYPE_VOCAB, HIDDEN), jnp.float32),
        "emb_ln_g": jnp.ones((HIDDEN,), jnp.float32),
        "emb_ln_b": jnp.zeros((HIDDEN,), jnp.float32),
        "pooler": {"w": pool_w, "b": pool_b},
        "layers": [],
    }
    for l in range(LAYERS):
        lk = jax.random.split(keys[8 + l], 6)
        qw, qb = dense_wb(lk[0], HIDDEN, HIDDEN)
        kw, kb = dense_wb(lk[1], HIDDEN, HIDDEN)
        vw, vb = dense_wb(lk[2], HIDDEN, HIDDEN)
        ow, ob = dense_wb(lk[3], HIDDEN, HIDDEN)
        f1w, f1b = dense_wb(lk[4], HIDDEN, FFN)
        f2w, f2b = dense_wb(lk[5], FFN, HIDDEN)
        params["layers"].append({
            # head-major projection weights: in-kernel head selection is a free
            # leading-dim slice (no lane-offset slicing of a (S,3H) buffer)
            "wq": qw.reshape(HIDDEN, HEADS, HEAD_DIM).transpose(1, 0, 2).astype(ACT_DTYPE),
            "wk": kw.reshape(HIDDEN, HEADS, HEAD_DIM).transpose(1, 0, 2).astype(ACT_DTYPE),
            "wv": vw.reshape(HIDDEN, HEADS, HEAD_DIM).transpose(1, 0, 2).astype(ACT_DTYPE),
            "bq": qb.reshape(HEADS, 1, HEAD_DIM),
            "bk": kb.reshape(HEADS, 1, HEAD_DIM),
            "bv": vb.reshape(HEADS, 1, HEAD_DIM),
            # O-projection split per head: absorbs the head merge (no lane concat)
            "wo": ow.reshape(HEADS, HEAD_DIM, HIDDEN).astype(ACT_DTYPE),
            "bo": ob.reshape(1, HIDDEN),
            "ln1_g": jnp.ones((1, HIDDEN), jnp.float32),
            "ln1_b": jnp.zeros((1, HIDDEN), jnp.float32),
            "w1": f1w.astype(ACT_DTYPE), "b1": f1b.reshape(1, FFN),
            "w2": f2w.astype(ACT_DTYPE), "b2": f2b.reshape(1, HIDDEN),
            "ln2_g": jnp.ones((1, HIDDEN), jnp.float32),
            "ln2_b": jnp.zeros((1, HIDDEN), jnp.float32),
        })
    return params


def custom_e5_forward(params, input_ids, attention_mask=None, eval=False):
    """Mirrors CustomE5Model.forward: returns pooler_output by default, or
    (last_hidden_state, pooler_output) when eval=True."""
    B, S = input_ids.shape
    if attention_mask is None:
        attention_mask = jnp.ones((B, S), jnp.float32)
    attention_mask = attention_mask.astype(jnp.float32)

    # --- embeddings (gathers are XLA glue; LayerNorm is a Pallas kernel) ---
    # TODO(synk): token_type_ids assumed all-zero (matches the default HF call path).
    positions = jnp.arange(S)
    emb = (jnp.take(params["word_emb"], input_ids, axis=0)
           + jnp.take(params["pos_emb"], positions, axis=0)[None, :, :]
           + params["type_emb"][0][None, None, :])
    h = emb.reshape(B * S, HIDDEN).astype(ACT_DTYPE)
    h = pallas_layernorm(h, params["emb_ln_g"], params["emb_ln_b"], LN_EPS)
    h = h.reshape(B, S, HIDDEN)

    # additive attention bias: (B, 1, S); shared across heads inside the kernel
    bias = ((1.0 - attention_mask) * -1e9)[:, None, :]

    scale = 1.0 / float(HEAD_DIM) ** 0.5
    for lp in params["layers"]:
        # whole encoder layer (MHSA + Add&LN + FFN + Add&LN) in ONE pallas_call
        h = pallas_encoder_layer(h, bias, lp, scale)

    last_hidden_state = h

    # --- pooler: tanh(W @ hidden[:, 0] + b). Left to XLA: a (B, H) matmul is far
    # below one MXU pass; pallas_call launch overhead would exceed the compute.
    cls = last_hidden_state[:, 0, :].astype(jnp.float32)
    pooler_output = jnp.tanh(cls @ params["pooler"]["w"] + params["pooler"]["b"])

    if eval:
        return last_hidden_state, pooler_output
    return pooler_output


# ----------------------------- Main -----------------------------

if __name__ == "__main__":
    key = jax.random.PRNGKey(0)
    pkey, ikey = jax.random.split(key)

    params = init_params(pkey)

    B, S = 2, 8
    input_ids = jax.random.randint(ikey, (B, S), 1, VOCAB, dtype=jnp.int32)
    attention_mask = jnp.ones((B, S), jnp.float32).at[1, -2:].set(0.0)  # pad tail of seq 1

    pooled = custom_e5_forward(params, input_ids, attention_mask)       # eval=False path
    pooled = jax.block_until_ready(pooled)

    assert pooled.shape == (B, HIDDEN)
    assert bool(jnp.all(jnp.isfinite(pooled)))
    print("KERNEL_OK")
</pallas_src>

<mosaic_0001>
module attributes {stable_mosaic.version = 11 : i64} {
  func.func @ln_kernel(%arg0: i32, %arg1: memref<16x32xbf16, #tpu.memory_space<vmem>>, %arg2: memref<1x32xf32, #tpu.memory_space<vmem>>, %arg3: memref<1x32xf32, #tpu.memory_space<vmem>>, %arg4: memref<16x32xbf16, #tpu.memory_space<vmem>>) attributes {dimension_semantics = [#tpu.dimension_semantics<parallel>], iteration_bounds = array<i64: 1>, scalar_prefetch = 0 : i64, scratch_operands = 0 : i64, tpu.core_type = #tpu.core_type<tc>, window_params = [{transform_indices = @transform_0, window_bounds = array<i64: 16, 32>}, {pipeline_mode = #tpu.pipeline_mode<synchronous>, transform_indices = @transform_1, window_bounds = array<i64: 1, 32>}, {pipeline_mode = #tpu.pipeline_mode<synchronous>, transform_indices = @transform_2, window_bounds = array<i64: 1, 32>}, {transform_indices = @transform_3, window_bounds = array<i64: 16, 32>}]} {
    %c0 = arith.constant 0 : index
    %c0_0 = arith.constant 0 : index
    %0 = vector.load %arg1[%c0, %c0_0] : memref<16x32xbf16, #tpu.memory_space<vmem>>, vector<16x32xbf16>
    %1 = arith.extf %0 : vector<16x32xbf16> to vector<16x32xf32>
    %cst = arith.constant dense<0.000000e+00> : vector<16xf32>
    %2 = vector.multi_reduction <add>, %1, %cst [1] : vector<16x32xf32> to vector<16xf32>
    %3 = vector.shape_cast %2 : vector<16xf32> to vector<16x1xf32>
    %cst_1 = arith.constant 3.200000e+01 : f32
    %4 = vector.broadcast %cst_1 : f32 to vector<16x1xf32>
    %5 = arith.divf %3, %4 : vector<16x1xf32>
    %6 = vector.broadcast %5 : vector<16x1xf32> to vector<16x32xf32>
    %7 = arith.subf %1, %6 : vector<16x32xf32>
    %8 = arith.mulf %7, %7 : vector<16x32xf32>
    %cst_2 = arith.constant dense<0.000000e+00> : vector<16xf32>
    %9 = vector.multi_reduction <add>, %8, %cst_2 [1] : vector<16x32xf32> to vector<16xf32>
    %10 = vector.shape_cast %9 : vector<16xf32> to vector<16x1xf32>
    %cst_3 = arith.constant 3.200000e+01 : f32
    %11 = vector.broadcast %cst_3 : f32 to vector<16x1xf32>
    %12 = arith.divf %10, %11 : vector<16x1xf32>
    %13 = vector.broadcast %5 : vector<16x1xf32> to vector<16x32xf32>
    %14 = arith.subf %1, %13 : vector<16x32xf32>
    %cst_4 = arith.constant 9.99999996E-13 : f32
    %15 = vector.broadcast %cst_4 : f32 to vector<16x1xf32>
    %16 = arith.addf %12, %15 : vector<16x1xf32>
    %17 = math.rsqrt %16 : vector<16x1xf32>
    %18 = vector.broadcast %17 : vector<16x1xf32> to vector<16x32xf32>
    %19 = arith.mulf %14, %18 : vector<16x32xf32>
    %c0_5 = arith.constant 0 : index
    %c0_6 = arith.constant 0 : index
    %20 = vector.load %arg2[%c0_5, %c0_6] : memref<1x32xf32, #tpu.memory_space<vmem>>, vector<1x32xf32>
    %21 = vector.broadcast %20 : vector<1x32xf32> to vector<16x32xf32>
    %22 = arith.mulf %19, %21 : vector<16x32xf32>
    %c0_7 = arith.constant 0 : index
    %c0_8 = arith.constant 0 : index
    %23 = vector.load %arg3[%c0_7, %c0_8] : memref<1x32xf32, #tpu.memory_space<vmem>>, vector<1x32xf32>
    %24 = vector.broadcast %23 : vector<1x32xf32> to vector<16x32xf32>
    %25 = arith.addf %22, %24 : vector<16x32xf32>
    %26 = arith.truncf %25 : vector<16x32xf32> to vector<16x32xbf16>
    %c0_9 = arith.constant 0 : index
    %c0_10 = arith.constant 0 : index
    %27 = vector.load %arg4[%c0_9, %c0_10] : memref<16x32xbf16, #tpu.memory_space<vmem>>, vector<16x32xbf16>
    tpu.vector_store %arg4[%c0_9, %c0_10], %26 {strides = array<i32>} : memref<16x32xbf16, #tpu.memory_space<vmem>>, vector<16x32xbf16>,
    return
  }
  func.func @transform_0(%arg0: i32) -> (i32, i32) {
    %c0_i32 = arith.constant 0 : i32
    %c0_i32_0 = arith.constant 0 : i32
    return %arg0, %c0_i32 : i32, i32
  }
  func.func @transform_1(%arg0: i32) -> (i32, i32) {
    %c0_i32 = arith.constant 0 : i32
    %c0_i32_0 = arith.constant 0 : i32
    %c0_i32_1 = arith.constant 0 : i32
    return %c0_i32, %c0_i32_0 : i32, i32
  }
  func.func @transform_2(%arg0: i32) -> (i32, i32) {
    %c0_i32 = arith.constant 0 : i32
    %c0_i32_0 = arith.constant 0 : i32
    %c0_i32_1 = arith.constant 0 : i32
    return %c0_i32, %c0_i32_0 : i32, i32
  }
  func.func @transform_3(%arg0: i32) -> (i32, i32) {
    %c0_i32 = arith.constant 0 : i32
    %c0_i32_0 = arith.constant 0 : i32
    return %arg0, %c0_i32 : i32, i32
  }
}

</mosaic_0001>

<llo_original>
// kernel: tpu_custom_call.1
$region0: #{tpu_custom_call.1}
  #allocation0 [shape = 'u32[]', space=smem, size = 0x4, offset = 0x4, fixed_abs, tag = 'smem constant byte address 0x4 - core index']
  #allocation1 [shape = 'u32[72,128]{1,0:T(1,128)}', space=vmem, size = 0x9000, scoped, tag = 'internal scratch']
  %s0 = inlined_call_operand.hbm [shape: bf16[16,32], index: 0, kind: input, shape index: {}]
  %s1 = inlined_call_operand.hbm [shape: f32[1,32], index: 1, kind: input, shape index: {}]
  %s2 = inlined_call_operand.vmem [shape: f32[1,32], index: 2, kind: input, shape index: {}]
  %s3 = inlined_call_operand.hbm [shape: bf16[16,32], index: 3, kind: output, shape index: {}]
  %s4 = sld [smem:[#allocation0]]
  $region30: #{tpu_custom_call.1} parent=0
    _
  %s6 = ssub.s32 1, %s4
  %s7 = scalar_select 0, %s6, %s4
  $region1: #{tpu_custom_call.1} parent=0
    #allocation2 [shape = 'u8[4096]{0}', space=vmem, size = 0x1000, scoped, tag = 'input window, operand 0, single buffered']
    #allocation3 [shape = 's32[1]{0}', space=sflag, size = 0x4, scoped, tag = 'scoped memory for tpu_custom_call.1']
    #allocation4 [shape = 's32[1]{0}', space=sflag, size = 0x4, scoped, tag = 'scoped memory for tpu_custom_call.1']
    #allocation5 [shape = 'u8[512]{0}', space=vmem, size = 0x400, scoped, tag = 'input window, operand 1, single buffered']
    #allocation6 [shape = 's32[1]{0}', space=sflag, size = 0x4, scoped, tag = 'scoped memory for tpu_custom_call.1']
    #allocation7 [shape = 'u8[4096]{0}', space=vmem, size = 0x1000, scoped, tag = 'output window, operand 0, single buffered']
    %8 = vsyncpa [#allocation3], 0
    %9 = vsyncpa [#allocation6], 0
    %10 = vsyncpa [#allocation4], 0
    // Predicated region
    $region2: #{tpu_custom_call.1} parent=1 // pred_check
      _
    $region3: #{tpu_custom_call.1} parent=1 // pred_check_branch
      %12 = sbr.rel (0) target = $region5
    $region4: #{tpu_custom_call.1} parent=1 // pred_region
      %14 = vsyncadd [#allocation3], 0
      %s15 = sshll.u32 %s0, 4
      %s16 = int_to_ptr.hbm [resolvable:$true] %s15
      %s17 = sshll.u32 [#allocation2], 4
      %s18 = int_to_ptr.vmem [resolvable:$true] %s17
      %23 = dma.hbm_to_vmem [thread:$0]  %s16, 128, %s18, [#allocation3], 64, 64, 4
    $region5: #{tpu_custom_call.1} parent=1 // pred_fallthru
      _
    // Predicated region
    $region6: #{tpu_custom_call.1} parent=1 // pred_check
      _
    $region7: #{tpu_custom_call.1} parent=1 // pred_check_branch
      %25 = sbr.rel (0) target = $region9
    $region8: #{tpu_custom_call.1} parent=1 // pred_region
      %27 = vsyncadd [#allocation6], 0
      %s29 = sshll.u32 %s1, 4
      %s30 = int_to_ptr.hbm [resolvable:$true] %s29
      %s31 = sshll.u32 [#allocation5], 4
      %s32 = int_to_ptr.vmem [resolvable:$true] %s31
      %34 = dma.hbm_to_vmem [thread:$0]  %s30, 16, %s32, [#allocation6]
    $region9: #{tpu_custom_call.1} parent=1 // pred_fallthru
      _
    // Predicated region
    $region10: #{tpu_custom_call.1} parent=1 // pred_check
      _
    $region11: #{tpu_custom_call.1} parent=1 // pred_check_branch
      %36 = sbr.rel (0) target = $region13
    $region12: #{tpu_custom_call.1} parent=1 // pred_region
      _
    $region13: #{tpu_custom_call.1} parent=1 // pred_fallthru
      _
    // Predicated region
    $region14: #{tpu_custom_call.1} parent=1 // pred_check
      _
    $region15: #{tpu_custom_call.1} parent=1 // pred_check_branch
      %38 = sbr.rel (0) target = $region17
    $region16: #{tpu_custom_call.1} parent=1 // pred_region
      %40 = dma.done [#allocation3], 128
    $region17: #{tpu_custom_call.1} parent=1 // pred_fallthru
      _
    // Predicated region
    $region18: #{tpu_custom_call.1} parent=1 // pred_check
      _
    $region19: #{tpu_custom_call.1} parent=1 // pred_check_branch
      %42 = sbr.rel (0) target = $region21
    $region20: #{tpu_custom_call.1} parent=1 // pred_region
      %44 = dma.done [#allocation6], 16
    $region21: #{tpu_custom_call.1} parent=1 // pred_fallthru
      _
    %v45 = vld [vmem:[#allocation2] sm:$0xf]
    %v46 = vld [vmem:[#allocation2 + $0x4] sm:$0xf]
    %v47 = vunpack.c.l.bf16 %v45
    %v48 = vunpack.c.l.bf16 %v46
    %vm49 = vcmask 261120
    %v50 = vsel %vm49, %v47, 0.0
    %51 = vadd.xlane.f32.xlu0 %v50
    %v52 = vpop.xlane.xlu0 %51
    %v53 = vsel %vm49, %v48, 0.0
    %54 = vadd.xlane.f32.xlu0 %v53
    %v55 = vpop.xlane.xlu0 %54
    %v56 = vrcp.pop 32.0
    %v57 = vmul.f32 32.0, %v56
    %v58 = vsub.f32 1.0, %v57
    %v59 = vmul.f32 %v56, %v58
    %v60 = vadd.f32 %v56, %v59
    %vm61 = vweird.f32 %v56
    %v62 = vsel %vm61, %v56, %v60
    %v63 = vmul.f32 %v52, %v62
    %v64 = vmul.f32 %v55, %v62
    %v65 = vsub.f32 %v47, %v63
    %v66 = vsub.f32 %v48, %v64
    %v67 = vmul.f32 %v65, %v65
    %v68 = vmul.f32 %v66, %v66
    %v69 = vsel %vm49, %v67, 0.0
    %70 = vadd.xlane.f32.xlu0 %v69
    %v71 = vpop.xlane.xlu0 %70
    %v72 = vsel %vm49, %v68, 0.0
    %73 = vadd.xlane.f32.xlu0 %v72
    %v74 = vpop.xlane.xlu0 %73
    %v75 = vmul.f32 %v71, %v62
    %v76 = vmul.f32 %v74, %v62
    %v77 = vadd.f32 %v75, 1e-12
    %v78 = vadd.f32 %v76, 1e-12
    %v79 = vrsqrt.pop %v77
    %v80 = vmul.f32 %v79, %v77
    %v81 = vmul.f32 %v80, %v79
    %v82 = vmul.f32 0.5, %v81
    %v83 = vsub.f32 1.5, %v82
    %v84 = vmul.f32 %v79, %v83
    %vm85 = vweird.f32 %v77
    %vm86 = vweird.f32 %v79
    %vm87 = vmor %vm85, %vm86
    %v88 = vsel %vm87, %v79, %v84
    %v89 = vrsqrt.pop %v78
    %v90 = vmul.f32 %v89, %v78
    %v91 = vmul.f32 %v90, %v89
    %v92 = vmul.f32 0.5, %v91
    %v93 = vsub.f32 1.5, %v92
    %v94 = vmul.f32 %v89, %v93
    %vm95 = vweird.f32 %v78
    %vm96 = vweird.f32 %v89
    %vm97 = vmor %vm95, %vm96
    %v98 = vsel %vm97, %v89, %v94
    %v99 = vmul.f32 %v65, %v88
    %v100 = vmul.f32 %v66, %v98
    %v101 = vld [vmem:[#allocation5] sm:$0x1]
    %v103 = vperm.slane %v101, 0
    %v105 = vmul.f32 %v99, %v103
    %v106 = vmul.f32 %v100, %v103
    %v107 = vld [vmem:[%s2] sm:$0x1]
    %v109 = vperm.slane %v107, 0
    %v111 = vadd.f32 %v105, %v109
    %v112 = vadd.f32 %v106, %v109
    %v113 = vpack.c.bf16 %v111, %v111
    %v114 = vpack.c.bf16 %v112, %v112
    %vm115 = vcmask 257024
    %116 = vst.msk [vmem:[#allocation7] sm:$0xf] %vm115, %v113
    %117 = vst.msk [vmem:[#allocation7 + $0x4] sm:$0xf] %vm115, %v114
    // Predicated region
    $region22: #{tpu_custom_call.1} parent=1 // pred_check
      _
    $region23: #{tpu_custom_call.1} parent=1 // pred_check_branch
      %119 = sbr.rel (0) target = $region25
    $region24: #{tpu_custom_call.1} parent=1 // pred_region
      %121 = vsyncadd [#allocation4], 0
      %s122 = sshll.u32 [#allocation7], 4
      %s123 = int_to_ptr.vmem [resolvable:$true] %s122
      %s124 = sshll.u32 %s3, 4
      %s125 = int_to_ptr.hbm [resolvable:$true] %s124
      %130 = dma.vmem_to_hbm [thread:$0]  %s123, 128, %s125, [#allocation4], 64, 64, 4
    $region25: #{tpu_custom_call.1} parent=1 // pred_fallthru
      _
    // Predicated region
    $region26: #{tpu_custom_call.1} parent=1 // pred_check
      _
    $region27: #{tpu_custom_call.1} parent=1 // pred_check_branch
      %132 = sbr.rel (0) target = $region29
    $region28: #{tpu_custom_call.1} parent=1 // pred_region
      %134 = dma.done [#allocation4], 128
    $region29: #{tpu_custom_call.1} parent=1 // pred_fallthru
      _
    %135 = vsyncpa [#allocation3], 1
    %136 = vsyncpa [#allocation6], 1
    %137 = vsyncpa [#allocation4], 1

</llo_original>
